<compile_context>
chip_gen: v5e
topology: v5e:2x2
jax: 0.10.0
libtpu: 0.0.40
codegen_flags: <defaults>
</compile_context>

<pallas_src>
import functools

import jax
import jax.numpy as jnp
from jax import lax
from jax.experimental import pallas as pl
from jax.experimental.pallas import tpu as pltpu


def _round_up(x, m):
    return ((x + m - 1) // m) * m


def _vmem_limit_bytes():
    # ~7/8 of physical VMEM with headroom (v5e/v6e: 128 -> 112 MiB, v7x: 64 -> 56 MiB).
    try:
        cap = int(pltpu.get_tpu_info().vmem_capacity_bytes)
        if cap > 0:
            return (cap // 8) * 7
    except Exception:
        pass
    return 56 * 1024 * 1024  # conservative fallback, safe on every generation


def _conv_in_kernel(p_ref, w_ref, g_ref, b_ref, o_ref, s_ref, ss_ref,
                    *, row_tile, inv_n, eps):
    """One (image, row-tile) per grid step. Channels on sublanes, HW on lanes.

    p_ref  : (Kpad, row_tile)   im2col patches for this tile (bf16 or f32)
    w_ref  : (Cout_pad, Kpad)   conv weight slab (zero padded)
    g_ref  : (Cout_pad, 1)      InstanceNorm scale (f32, zero padded)
    b_ref  : (Cout_pad, 1)      InstanceNorm shift (f32, zero padded)
    o_ref  : (Cout_pad, HWpad)  f32 output block, resident across row tiles
    s_ref  : (Cout_pad, 1)      f32 running per-channel sum (scratch)
    ss_ref : (Cout_pad, 1)      f32 running per-channel sum of squares (scratch)
    """
    r = pl.program_id(1)

    @pl.when(r == 0)
    def _init():
        s_ref[...] = jnp.zeros_like(s_ref)
        ss_ref[...] = jnp.zeros_like(ss_ref)

    # Single MXU matmul for this row tile, f32 accumulation.
    y = jnp.dot(w_ref[...], p_ref[...], preferred_element_type=jnp.float32)

    # TODO(synk): dropout_op is None in this configuration (identity); a
    # training-time Dropout(p>0) would use pltpu.prng_seed/stateful_bernoulli here.

    # Per-tile stats folded into the main loop (hide under the patch DMA).
    s_ref[...] += jnp.sum(y, axis=1, keepdims=True)
    ss_ref[...] += jnp.sum(y * y, axis=1, keepdims=True)

    # Lane-dense (row_tile = multiple of 128) unmasked store of the raw conv
    # result into the resident output block for this image.
    start = pl.multiple_of(r * row_tile, row_tile)
    o_ref[:, pl.ds(start, row_tile)] = y

    @pl.when(r == pl.num_programs(1) - 1)
    def _finalize():
        # InstanceNorm2d stats over the true spatial positions (padded lanes /
        # padded channels hold exact zeros; inv_n uses the true H*W).
        # Single-pass var = E[x^2] - mean^2 in f32; the clamp guards
        # cancellation (conv activations here are near zero-mean).
        mean = s_ref[...] * jnp.float32(inv_n)
        var = jnp.maximum(ss_ref[...] * jnp.float32(inv_n) - mean * mean, 0.0)
        scale = lax.rsqrt(var + eps) * g_ref[...]
        shift = b_ref[...] - mean * scale
        o_ref[...] = (o_ref[...] * scale + shift).astype(o_ref.dtype)


def conv_dropout_norm(x_nchw, weight_oihw, gamma, beta, *, eps=1e-5,
                      compute_dtype=jnp.bfloat16, row_tile=None):
    """Forward pass of ConvDropoutNorm.

    x_nchw      : (N, Cin, H, W)      float32
    weight_oihw : (Cout, Cin, KH, KW) float32   (PyTorch Conv2d layout)
    gamma, beta : (Cout,)             float32   (InstanceNorm2d affine)
    returns     : (N, Cout, H, W)     float32
    """
    N, Cin, H, W = x_nchw.shape
    Cout, Cin_w, KH, KW = weight_oihw.shape
    assert Cin == Cin_w
    ph, pw = (KH - 1) // 2, (KW - 1) // 2

    LANE = 128
    sub = 8 * (4 // jnp.dtype(compute_dtype).itemsize)  # 8 for f32, 16 for bf16
    HW = H * W
    K = KH * KW * Cin
    Kpad = _round_up(K, sub)
    Cpad = _round_up(Cout, sub)

    # Spatial positions live on the 128-lane axis; tile them.
    if row_tile is None:
        # >=2048 lanes per step amortizes the ~0.35us per-grid-step overhead.
        row_tile = 2048 if HW > 2048 else HW
    row_tile = min(_round_up(max(row_tile, 1), LANE), _round_up(HW, LANE))
    HWpad = _round_up(HW, row_tile)
    num_row_tiles = HWpad // row_tile

    # ---- wrapper-side im2col straight from NCHW (taps stacked along the
    # channel/sublane axis, spatial flattened onto lanes). K padded only to
    # sublane granularity, not 128; no NCHW<->NHWC transposes anywhere.
    # TODO(synk): fusing the patch extraction into the kernel (halo-row DMA +
    # in-VMEM shifted taps) would remove this ~KH*KW x HBM im2col intermediate.
    x_pad = jnp.pad(x_nchw.astype(jnp.float32),
                    ((0, 0), (0, 0), (ph, ph), (pw, pw)))
    taps = [x_pad[:, :, kh:kh + H, kw:kw + W]
            for kh in range(KH) for kw in range(KW)]
    patches = jnp.concatenate(taps, axis=1).reshape(N, K, HW)
    patches = jnp.pad(patches, ((0, 0), (0, Kpad - K), (0, HWpad - HW)))
    patches = patches.astype(compute_dtype)

    # (Cout, Cin, KH, KW) -> (Cout, KH, KW, Cin) -> (Cout, K): matches tap order.
    w_slab = jnp.transpose(weight_oihw, (0, 2, 3, 1)).reshape(Cout, K)
    w_slab = jnp.pad(w_slab, ((0, Cpad - Cout), (0, Kpad - K))).astype(compute_dtype)

    gamma_p = jnp.pad(gamma.astype(jnp.float32), (0, Cpad - Cout)).reshape(Cpad, 1)
    beta_p = jnp.pad(beta.astype(jnp.float32), (0, Cpad - Cout)).reshape(Cpad, 1)

    kernel = functools.partial(_conv_in_kernel, row_tile=row_tile,
                               inv_n=1.0 / HW, eps=eps)

    # TODO(synk): when Cpad*HWpad*4 (+ double-buffered patch tiles) exceeds the
    # VMEM budget (very large nnU-Net resolutions, esp. v7x's 64 MiB), split
    # into a conv+stats pass and a light normalize pallas_call.
    # TODO(synk): when N < number of TensorCores (v7x megacore, N=1), split the
    # row-tile axis across cores with per-core partial stats + a tiny combine.
    # TODO(synk): for the 256-320 channel nnU-Net layers, tile K/Cout in
    # 256-multiples with an extra K grid axis to fill the v6e/v7x 256x256 MXU.
    out = pl.pallas_call(
        kernel,
        out_shape=jax.ShapeDtypeStruct((N, Cpad, HWpad), jnp.float32),
        grid_spec=pltpu.PrefetchScalarGridSpec(
            num_scalar_prefetch=0,
            grid=(N, num_row_tiles),
            in_specs=[
                pl.BlockSpec((None, Kpad, row_tile), lambda n, r: (n, 0, r)),
                pl.BlockSpec((Cpad, Kpad), lambda n, r: (0, 0)),
                pl.BlockSpec((Cpad, 1), lambda n, r: (0, 0)),
                pl.BlockSpec((Cpad, 1), lambda n, r: (0, 0)),
            ],
            out_specs=pl.BlockSpec((None, Cpad, HWpad), lambda n, r: (n, 0, 0)),
            scratch_shapes=[pltpu.VMEM((Cpad, 1), jnp.float32),
                            pltpu.VMEM((Cpad, 1), jnp.float32)],
        ),
        compiler_params=pltpu.CompilerParams(
            dimension_semantics=("parallel", "arbitrary"),
            vmem_limit_bytes=_vmem_limit_bytes(),
        ),
    )(patches, w_slab, gamma_p, beta_p)

    # (N, Cout_pad, HWpad) is already NCHW-flat: slice padding, reshape, done.
    return out[:, :Cout, :HW].reshape(N, Cout, H, W)


def _reference(x_nchw, weight_oihw, gamma, beta, eps=1e-5):
    """Plain-JAX reference: conv2d (padding=1, stride=1, no bias) + InstanceNorm2d."""
    y = lax.conv_general_dilated(
        x_nchw, weight_oihw, window_strides=(1, 1), padding=((1, 1), (1, 1)),
        dimension_numbers=("NCHW", "OIHW", "NCHW"))
    mean = jnp.mean(y, axis=(2, 3), keepdims=True)
    var = jnp.mean((y - mean) ** 2, axis=(2, 3), keepdims=True)
    yn = (y - mean) / jnp.sqrt(var + eps)
    return yn * gamma.reshape(1, -1, 1, 1) + beta.reshape(1, -1, 1, 1)


if __name__ == "__main__":
    # ConvDropoutNorm(nn.Conv2d, input_channels=4, output_channels=8,
    #                 kernel_size=3, stride=1, conv_bias=False,
    #                 norm_op=nn.InstanceNorm2d,
    #                 norm_op_kwargs={'eps': 1e-5, 'affine': True})
    N, Cin, Cout, H, W, KH, KW = 2, 4, 8, 16, 16, 3, 3

    key = jax.random.PRNGKey(0)
    kx, kwt, kg, kb = jax.random.split(key, 4)
    x = jax.random.normal(kx, (N, Cin, H, W), dtype=jnp.float32)
    fan_in = Cin * KH * KW
    weight = jax.random.normal(kwt, (Cout, Cin, KH, KW), jnp.float32) / jnp.sqrt(fan_in)
    gamma = 1.0 + 0.1 * jax.random.normal(kg, (Cout,), jnp.float32)
    beta = 0.1 * jax.random.normal(kb, (Cout,), jnp.float32)

    ref = _reference(x, weight, gamma, beta)

    # Exact-math check (f32 MXU inputs); row_tile=128 exercises the multi-tile
    # resident-output / streamed-patches path.
    out_f32 = conv_dropout_norm(x, weight, gamma, beta,
                                compute_dtype=jnp.float32, row_tile=128)
    out_f32 = jax.block_until_ready(out_f32)
    assert out_f32.shape == (N, Cout, H, W)
    assert jnp.allclose(out_f32, ref, atol=1e-4, rtol=1e-4), \
        f"f32 path max abs err = {jnp.max(jnp.abs(out_f32 - ref))}"

    # Fast path: bf16 MXU inputs, f32 accumulation + f32 norm (bf16 input
    # rounding limits agreement with the pure-f32 reference to ~1e-2).
    out_bf16 = conv_dropout_norm(x, weight, gamma, beta,
                                 compute_dtype=jnp.bfloat16, row_tile=128)
    out_bf16 = jax.block_until_ready(out_bf16)
    assert out_bf16.shape == (N, Cout, H, W)
    assert jnp.allclose(out_bf16, ref, atol=2e-2, rtol=2e-2), \
        f"bf16 path max abs err = {jnp.max(jnp.abs(out_bf16 - ref))}"

    # Odd spatial size (HW=100, not a multiple of 128) exercises the padded-lane
    # stats path, the single-row-tile case and the default row_tile logic.
    x2 = jax.random.normal(jax.random.PRNGKey(1), (1, Cin, 10, 10), jnp.float32)
    ref2 = _reference(x2, weight, gamma, beta)
    out2 = conv_dropout_norm(x2, weight, gamma, beta, compute_dtype=jnp.float32)
    out2 = jax.block_until_ready(out2)
    assert out2.shape == (1, Cout, 10, 10)
    assert jnp.allclose(out2, ref2, atol=1e-4, rtol=1e-4), \
        f"odd-size path max abs err = {jnp.max(jnp.abs(out2 - ref2))}"

    print("KERNEL_OK")
</pallas_src>

<mosaic_0001>
module attributes {stable_mosaic.version = 11 : i64} {
  func.func @_conv_in_kernel(%arg0: i32, %arg1: i32, %arg2: memref<1x40x128xf32, #tpu.memory_space<vmem>>, %arg3: memref<8x40xf32, #tpu.memory_space<vmem>>, %arg4: memref<8x1xf32, #tpu.memory_space<vmem>>, %arg5: memref<8x1xf32, #tpu.memory_space<vmem>>, %arg6: memref<1x8x256xf32, #tpu.memory_space<vmem>>, %arg7: memref<8x1xf32, #tpu.memory_space<vmem>>, %arg8: memref<8x1xf32, #tpu.memory_space<vmem>>) attributes {dimension_semantics = [#tpu.dimension_semantics<parallel>, #tpu.dimension_semantics<arbitrary>], iteration_bounds = array<i64: 2, 2>, scalar_prefetch = 0 : i64, scratch_operands = 2 : i64, tpu.core_type = #tpu.core_type<tc>, window_params = [{transform_indices = @transform_0, window_bounds = array<i64: 1, 40, 128>}, {pipeline_mode = #tpu.pipeline_mode<synchronous>, transform_indices = @transform_1, window_bounds = array<i64: 8, 40>}, {pipeline_mode = #tpu.pipeline_mode<synchronous>, transform_indices = @transform_2, window_bounds = array<i64: 8, 1>}, {pipeline_mode = #tpu.pipeline_mode<synchronous>, transform_indices = @transform_3, window_bounds = array<i64: 8, 1>}, {transform_indices = @transform_4, window_bounds = array<i64: 1, 8, 256>}]} {
    %c0_i32 = arith.constant 0 : i32
    %0 = arith.cmpi eq, %arg1, %c0_i32 : i32
    %1 = arith.extui %0 : i1 to i32
    %c0_i32_0 = arith.constant 0 : i32
    %2 = arith.cmpi ne, %1, %c0_i32_0 : i32
    scf.if %2 {
      %cst_18 = arith.constant 0.000000e+00 : f32
      %27 = vector.broadcast %cst_18 : f32 to vector<8x1xf32>
      %c0_19 = arith.constant 0 : index
      %c0_20 = arith.constant 0 : index
      %28 = vector.load %arg7[%c0_19, %c0_20] : memref<8x1xf32, #tpu.memory_space<vmem>>, vector<8x1xf32>
      tpu.vector_store %arg7[%c0_19, %c0_20], %27 {strides = array<i32>} : memref<8x1xf32, #tpu.memory_space<vmem>>, vector<8x1xf32>,
      %cst_21 = arith.constant 0.000000e+00 : f32
      %29 = vector.broadcast %cst_21 : f32 to vector<8x1xf32>
      %c0_22 = arith.constant 0 : index
      %c0_23 = arith.constant 0 : index
      %30 = vector.load %arg8[%c0_22, %c0_23] : memref<8x1xf32, #tpu.memory_space<vmem>>, vector<8x1xf32>
      tpu.vector_store %arg8[%c0_22, %c0_23], %29 {strides = array<i32>} : memref<8x1xf32, #tpu.memory_space<vmem>>, vector<8x1xf32>,
    } else {
    }
    %c0 = arith.constant 0 : index
    %c0_1 = arith.constant 0 : index
    %3 = vector.load %arg3[%c0, %c0_1] : memref<8x40xf32, #tpu.memory_space<vmem>>, vector<8x40xf32>
    %c0_2 = arith.constant 0 : index
    %c0_3 = arith.constant 0 : index
    %c0_4 = arith.constant 0 : index
    %4 = vector.load %arg2[%c0_2, %c0_3, %c0_4] : memref<1x40x128xf32, #tpu.memory_space<vmem>>, vector<1x40x128xf32>
    %5 = vector.shape_cast %4 : vector<1x40x128xf32> to vector<40x128xf32>
    %cst = arith.constant dense<0.000000e+00> : vector<8x128xf32>
    %6 = tpu.matmul %3, %5, %cst {dimension_numbers = #tpu.dot_dimension_numbers<[1], [0], [0], [1], [0, 0, 1, 1], [], []>} : vector<8x40xf32>, vector<40x128xf32>, vector<8x128xf32> -> vector<8x128xf32>
    %c0_5 = arith.constant 0 : index
    %c0_6 = arith.constant 0 : index
    %7 = vector.load %arg7[%c0_5, %c0_6] : memref<8x1xf32, #tpu.memory_space<vmem>>, vector<8x1xf32>
    %cst_7 = arith.constant dense<0.000000e+00> : vector<8xf32>
    %8 = vector.multi_reduction <add>, %6, %cst_7 [1] : vector<8x128xf32> to vector<8xf32>
    %9 = vector.shape_cast %8 : vector<8xf32> to vector<8x1xf32>
    %10 = arith.addf %7, %9 : vector<8x1xf32>
    %c0_8 = arith.constant 0 : index
    %c0_9 = arith.constant 0 : index
    %11 = vector.load %arg7[%c0_8, %c0_9] : memref<8x1xf32, #tpu.memory_space<vmem>>, vector<8x1xf32>
    tpu.vector_store %arg7[%c0_8, %c0_9], %10 {strides = array<i32>} : memref<8x1xf32, #tpu.memory_space<vmem>>, vector<8x1xf32>,
    %c0_10 = arith.constant 0 : index
    %c0_11 = arith.constant 0 : index
    %12 = vector.load %arg8[%c0_10, %c0_11] : memref<8x1xf32, #tpu.memory_space<vmem>>, vector<8x1xf32>
    %13 = arith.mulf %6, %6 : vector<8x128xf32>
    %cst_12 = arith.constant dense<0.000000e+00> : vector<8xf32>
    %14 = vector.multi_reduction <add>, %13, %cst_12 [1] : vector<8x128xf32> to vector<8xf32>
    %15 = vector.shape_cast %14 : vector<8xf32> to vector<8x1xf32>
    %16 = arith.addf %12, %15 : vector<8x1xf32>
    %c0_13 = arith.constant 0 : index
    %c0_14 = arith.constant 0 : index
    %17 = vector.load %arg8[%c0_13, %c0_14] : memref<8x1xf32, #tpu.memory_space<vmem>>, vector<8x1xf32>
    tpu.vector_store %arg8[%c0_13, %c0_14], %16 {strides = array<i32>} : memref<8x1xf32, #tpu.memory_space<vmem>>, vector<8x1xf32>,
    %c128_i32 = arith.constant 128 : i32
    %18 = arith.muli %arg1, %c128_i32 : i32
    %19 = tpu.assume_multiple %18, 128 : i32
    %c0_15 = arith.constant 0 : index
    %c0_16 = arith.constant 0 : index
    %20 = arith.index_cast %19 : i32 to index
    %21 = vector.load %arg6[%c0_15, %c0_16, %20] : memref<1x8x256xf32, #tpu.memory_space<vmem>>, vector<1x8x128xf32>
    %22 = vector.shape_cast %21 : vector<1x8x128xf32> to vector<8x128xf32>
    %23 = vector.shape_cast %6 : vector<8x128xf32> to vector<1x8x128xf32>
    tpu.vector_store %arg6[%c0_15, %c0_16, %20], %23 {strides = array<i32>} : memref<1x8x256xf32, #tpu.memory_space<vmem>>, vector<1x8x128xf32>,
    %c1_i32 = arith.constant 1 : i32
    %24 = arith.cmpi eq, %arg1, %c1_i32 : i32
    %25 = arith.extui %24 : i1 to i32
    %c0_i32_17 = arith.constant 0 : i32
    %26 = arith.cmpi ne, %25, %c0_i32_17 : i32
    scf.if %26 {
      %c0_18 = arith.constant 0 : index
      %c0_19 = arith.constant 0 : index
      %27 = vector.load %arg7[%c0_18, %c0_19] : memref<8x1xf32, #tpu.memory_space<vmem>>, vector<8x1xf32>
      %cst_20 = arith.constant 3.906250e-03 : f32
      %28 = vector.broadcast %cst_20 : f32 to vector<8x1xf32>
      %29 = arith.mulf %27, %28 : vector<8x1xf32>
      %c0_21 = arith.constant 0 : index
      %c0_22 = arith.constant 0 : index
      %30 = vector.load %arg8[%c0_21, %c0_22] : memref<8x1xf32, #tpu.memory_space<vmem>>, vector<8x1xf32>
      %cst_23 = arith.constant 3.906250e-03 : f32
      %31 = vector.broadcast %cst_23 : f32 to vector<8x1xf32>
      %32 = arith.mulf %30, %31 : vector<8x1xf32>
      %33 = arith.mulf %29, %29 : vector<8x1xf32>
      %34 = arith.subf %32, %33 : vector<8x1xf32>
      %cst_24 = arith.constant 0.000000e+00 : f32
      %35 = vector.broadcast %cst_24 : f32 to vector<8x1xf32>
      %36 = arith.maximumf %34, %35 : vector<8x1xf32>
      %cst_25 = arith.constant 9.99999974E-6 : f32
      %37 = vector.broadcast %cst_25 : f32 to vector<8x1xf32>
      %38 = arith.addf %36, %37 : vector<8x1xf32>
      %39 = math.rsqrt %38 : vector<8x1xf32>
      %c0_26 = arith.constant 0 : index
      %c0_27 = arith.constant 0 : index
      %40 = vector.load %arg4[%c0_26, %c0_27] : memref<8x1xf32, #tpu.memory_space<vmem>>, vector<8x1xf32>
      %41 = arith.mulf %39, %40 : vector<8x1xf32>
      %c0_28 = arith.constant 0 : index
      %c0_29 = arith.constant 0 : index
      %42 = vector.load %arg5[%c0_28, %c0_29] : memref<8x1xf32, #tpu.memory_space<vmem>>, vector<8x1xf32>
      %43 = arith.mulf %29, %41 : vector<8x1xf32>
      %44 = arith.subf %42, %43 : vector<8x1xf32>
      %c0_30 = arith.constant 0 : index
      %c0_31 = arith.constant 0 : index
      %c0_32 = arith.constant 0 : index
      %45 = vector.load %arg6[%c0_30, %c0_31, %c0_32] : memref<1x8x256xf32, #tpu.memory_space<vmem>>, vector<1x8x256xf32>
      %46 = vector.shape_cast %45 : vector<1x8x256xf32> to vector<8x256xf32>
      %47 = vector.broadcast %41 : vector<8x1xf32> to vector<8x256xf32>
      %48 = arith.mulf %46, %47 : vector<8x256xf32>
      %49 = vector.broadcast %44 : vector<8x1xf32> to vector<8x256xf32>
      %50 = arith.addf %48, %49 : vector<8x256xf32>
      %c0_33 = arith.constant 0 : index
      %c0_34 = arith.constant 0 : index
      %c0_35 = arith.constant 0 : index
      %51 = vector.load %arg6[%c0_33, %c0_34, %c0_35] : memref<1x8x256xf32, #tpu.memory_space<vmem>>, vector<1x8x256xf32>
      %52 = vector.shape_cast %51 : vector<1x8x256xf32> to vector<8x256xf32>
      %53 = vector.shape_cast %50 : vector<8x256xf32> to vector<1x8x256xf32>
      tpu.vector_store %arg6[%c0_33, %c0_34, %c0_35], %53 {strides = array<i32>} : memref<1x8x256xf32, #tpu.memory_space<vmem>>, vector<1x8x256xf32>,
    } else {
    }
    return
  }
  func.func @transform_0(%arg0: i32, %arg1: i32) -> (i32, i32, i32) {
    %c0_i32 = arith.constant 0 : i32
    %c0_i32_0 = arith.constant 0 : i32
    return %arg0, %c0_i32, %arg1 : i32, i32, i32
  }
  func.func @transform_1(%arg0: i32, %arg1: i32) -> (i32, i32) {
    %c0_i32 = arith.constant 0 : i32
    %c0_i32_0 = arith.constant 0 : i32
    %c0_i32_1 = arith.constant 0 : i32
    return %c0_i32, %c0_i32_0 : i32, i32
  }
  func.func @transform_2(%arg0: i32, %arg1: i32) -> (i32, i32) {
    %c0_i32 = arith.constant 0 : i32
    %c0_i32_0 = arith.constant 0 : i32
    %c0_i32_1 = arith.constant 0 : i32
    return %c0_i32, %c0_i32_0 : i32, i32
  }
  func.func @transform_3(%arg0: i32, %arg1: i32) -> (i32, i32) {
    %c0_i32 = arith.constant 0 : i32
    %c0_i32_0 = arith.constant 0 : i32
    %c0_i32_1 = arith.constant 0 : i32
    return %c0_i32, %c0_i32_0 : i32, i32
  }
  func.func @transform_4(%arg0: i32, %arg1: i32) -> (i32, i32, i32) {
    %c0_i32 = arith.constant 0 : i32
    %c0_i32_0 = arith.constant 0 : i32
    %c0_i32_1 = arith.constant 0 : i32
    return %arg0, %c0_i32, %c0_i32_0 : i32, i32, i32
  }
}

</mosaic_0001>

<llo_original>
// kernel: tpu_custom_call.1
$region0: #{tpu_custom_call.1}
  #allocation0 [shape = 'u32[]', space=smem, size = 0x4, offset = 0x4, fixed_abs, tag = 'smem constant byte address 0x4 - core index']
  #allocation1 [shape = 'u32[72,128]{1,0:T(1,128)}', space=vmem, size = 0x9000, scoped, tag = 'internal scratch']
  #allocation2 [shape = 'f32[8,1]{1,0:T(8,128)}', space=vmem, size = 0x1000, scoped, tag = 'scratch operand']
  #allocation3 [shape = 'f32[8,1]{1,0:T(8,128)}', space=vmem, size = 0x1000, scoped, tag = 'scratch operand']
  %s0 = inlined_call_operand.hbm [shape: f32[2,40,256], index: 0, kind: input, shape index: {}]
  %s1 = inlined_call_operand.vmem [shape: f32[8,40], index: 1, kind: input, shape index: {}]
  %s2 = inlined_call_operand.vmem [shape: f32[8,1], index: 2, kind: input, shape index: {}]
  %s3 = inlined_call_operand.vmem [shape: f32[8,1], index: 3, kind: input, shape index: {}]
  %s4 = inlined_call_operand.hbm [shape: f32[2,8,256], index: 4, kind: output, shape index: {}]
  %s5 = sld [smem:[#allocation0]]
  $region61: #{tpu_custom_call.1} parent=0
    _
  %s7 = ssub.s32 1, %s5
  %s8 = scalar_select 0, %s7, %s5
  $region1: #{tpu_custom_call.1} parent=0
    #allocation4 [shape = 'u8[40960]{0}', space=vmem, size = 0xa000, scoped, tag = 'input window, operand 0']
    #allocation5 [shape = 's32[2]{0}', space=sflag, size = 0x8, scoped, tag = 'scoped memory for tpu_custom_call.1']
    #allocation6 [shape = 's32[2]{0}', space=sflag, size = 0x8, scoped, tag = 'scoped memory for tpu_custom_call.1']
    #allocation7 [shape = 'u8[16384]{0}', space=vmem, size = 0x4000, scoped, tag = 'output window, operand 0']
    %9 = vsyncpa [#allocation5], 0
    %s10 = scalar_lea.sflag [#allocation5], 1
    %11 = vsyncpa %s10, 0
    %12 = vsyncpa [#allocation6], 0
    %s13 = scalar_lea.sflag [#allocation6], 1
    %14 = vsyncpa %s13, 0
    loop: start=0, step=1, limit=6
    $region2: #{tpu_custom_call.1} parent=1 // loop_pre_header
      _
    $region3: #{tpu_custom_call.1} parent=1 // loop_header
      %s16 = sphi 0, %s20
      %p17 = scmp.ge.s32.totalorder %s16, 6
      %s23 = sphi 0, %s35
      %s24 = sphi 0, %s31
      %s25 = sphi 0, %s23
      %s26 = sphi 0, %s24
      %s27 = sphi 0, %s25
      %s28 = sphi 0, %s26
      %s40 = sphi 0, %s42
      %s43 = sphi 0, %s40
      %s44 = sphi 0, %s43
      %s60 = sphi 0, %s44
      %s64 = sphi 0, %s64
      %s66 = sphi 0, %s64
      %s67 = sphi 0, %s66
      %s81 = sphi 0, %s67
      %s85 = sphi 0, %s85
      %s87 = sphi 0, %s85
      %s88 = sphi 0, %s87
      %s102 = sphi 0, %s88
      %s106 = sphi 0, %s106
      %s108 = sphi 0, %s106
      %s109 = sphi 0, %s108
      %s123 = sphi 0, %s109
      %s129 = sphi 0, %s131
      %s132 = sphi 0, %s129
      %s133 = sphi 0, %s132
      %s149 = sphi 0, %s133
    $region4: #{tpu_custom_call.1} parent=1 // loop_header_branch
      %19 = sbr.rel (%p17) target = $region8
    $region5: #{tpu_custom_call.1} parent=1 // loop_body
      %s21 = ssub.s32 %s16, 1
      %s22 = ssub.s32 %s16, 2
      %s29 = sadd.s32 1, %s24
      %p30 = scmp.ge.s32.totalorder %s29, 2
      %s31 = scalar_select %p30, 0, %s29
      %s32 = sadd.s32 1, %s23
      %s33 = scalar_select %p30, %s32, %s23
      %p34 = scmp.ge.s32.totalorder %s33, 2
      %s35 = scalar_select %p34, 0, %s33
      %s36 = ssub.s32 %s23, %s35
      %s37 = ssub.s32 %s24, %s31
      %s38 = sor.u32 %s36, %s37
      %p39 = scmp.eq.s32.totalorder %s38, 0
      %s41 = sadd.s32 %s40, 1
      %s42 = scalar_select %p39, %s40, %s41
      %p45 = pneg %p39
      %p46 = scmp.eq.s32.totalorder %s16, 3
      %p47 = por %p45, %p46
      %p48 = scmp.ne.s32.totalorder %s40, %s43
      %p49 = scmp.eq.s32.totalorder %s16, 0
      %p50 = por %p48, %p49
      %p51 = scmp.ne.s32.totalorder %s40, %s43
      %p52 = scmp.eq.s32.totalorder %s21, 3
      %p53 = por %p51, %p52
      %p54 = scmp.ne.s32.totalorder %s43, %s44
      %p55 = scmp.eq.s32.totalorder %s21, 0
      %p56 = por %p54, %p55
      %p57 = scmp.ne.s32.totalorder %s43, %s44
      %p58 = scmp.eq.s32.totalorder %s22, 3
      %p59 = por %p57, %p58
      %p61 = scmp.ne.s32.totalorder %s44, %s60
      %p62 = scmp.eq.s32.totalorder %s22, 0
      %p63 = por %p61, %p62
      %s65 = sadd.s32 %s64, 1
      %p68 = scmp.eq.s32.totalorder %s16, 3
      %p69 = scmp.ne.s32.totalorder %s64, %s66
      %p70 = scmp.eq.s32.totalorder %s16, 0
      %p71 = por %p69, %p70
      %p72 = scmp.ne.s32.totalorder %s64, %s66
      %p73 = scmp.eq.s32.totalorder %s21, 3
      %p74 = por %p72, %p73
      %p75 = scmp.ne.s32.totalorder %s66, %s67
      %p76 = scmp.eq.s32.totalorder %s21, 0
      %p77 = por %p75, %p76
      %p78 = scmp.ne.s32.totalorder %s66, %s67
      %p79 = scmp.eq.s32.totalorder %s22, 3
      %p80 = por %p78, %p79
      %p82 = scmp.ne.s32.totalorder %s67, %s81
      %p83 = scmp.eq.s32.totalorder %s22, 0
      %p84 = por %p82, %p83
      %s86 = sadd.s32 %s85, 1
      %p89 = scmp.eq.s32.totalorder %s16, 3
      %p90 = scmp.ne.s32.totalorder %s85, %s87
      %p91 = scmp.eq.s32.totalorder %s16, 0
      %p92 = por %p90, %p91
      %p93 = scmp.ne.s32.totalorder %s85, %s87
      %p94 = scmp.eq.s32.totalorder %s21, 3
      %p95 = por %p93, %p94
      %p96 = scmp.ne.s32.totalorder %s87, %s88
      %p97 = scmp.eq.s32.totalorder %s21, 0
      %p98 = por %p96, %p97
      %p99 = scmp.ne.s32.totalorder %s87, %s88
      %p100 = scmp.eq.s32.totalorder %s22, 3
      %p101 = por %p99, %p100
      %p103 = scmp.ne.s32.totalorder %s88, %s102
      %p104 = scmp.eq.s32.totalorder %s22, 0
      %p105 = por %p103, %p104
      %s107 = sadd.s32 %s106, 1
      %p110 = scmp.eq.s32.totalorder %s16, 3
      %p111 = scmp.ne.s32.totalorder %s106, %s108
      %p112 = scmp.eq.s32.totalorder %s16, 0
      %p113 = por %p111, %p112
      %p114 = scmp.ne.s32.totalorder %s106, %s108
      %p115 = scmp.eq.s32.totalorder %s21, 3
      %p116 = por %p114, %p115
      %p117 = scmp.ne.s32.totalorder %s108, %s109
      %p118 = scmp.eq.s32.totalorder %s21, 0
      %p119 = por %p117, %p118
      %p120 = scmp.ne.s32.totalorder %s108, %s109
      %p121 = scmp.eq.s32.totalorder %s22, 3
      %p122 = por %p120, %p121
      %p124 = scmp.ne.s32.totalorder %s109, %s123
      %p125 = scmp.eq.s32.totalorder %s22, 0
      %p126 = por %p124, %p125
      %s127 = ssub.s32 %s23, %s35
      %p128 = scmp.eq.s32.totalorder %s127, 0
      %s130 = sadd.s32 %s129, 1
      %s131 = scalar_select %p128, %s129, %s130
      %p134 = pneg %p128
      %p135 = scmp.eq.s32.totalorder %s16, 3
      %p136 = por %p134, %p135
      %p137 = scmp.ne.s32.totalorder %s129, %s132
      %p138 = scmp.eq.s32.totalorder %s16, 0
      %p139 = por %p137, %p138
      %p140 = scmp.ne.s32.totalorder %s129, %s132
      %p141 = scmp.eq.s32.totalorder %s21, 3
      %p142 = por %p140, %p141
      %p143 = scmp.ne.s32.totalorder %s132, %s133
      %p144 = scmp.eq.s32.totalorder %s21, 0
      %p145 = por %p143, %p144
      %p146 = scmp.ne.s32.totalorder %s132, %s133
      %p147 = scmp.eq.s32.totalorder %s22, 3
      %p148 = por %p146, %p147
      %p150 = scmp.ne.s32.totalorder %s133, %s149
      %p151 = scmp.eq.s32.totalorder %s22, 0
      %p152 = por %p150, %p151
      %p153 = scmp.le.s32.totalorder 1, %s16
      %p154 = scmp.lt.s32.totalorder %s16, 5
      %p155 = pnand %p153, %p154
      %p156 = pneg %p155
      // Predicated region
      $region9: #{tpu_custom_call.1} parent=5 // pred_check
        _
      $region10: #{tpu_custom_call.1} parent=5 // pred_check_branch
        %158 = sbr.rel (%p155) target = $region12
      $region11: #{tpu_custom_call.1} parent=5 // pred_region
        %s159 = ssub.s32 %s16, 1
        // Predicated region
        $region13: #{tpu_custom_call.1} parent=11 // pred_check
          %p160 = pneg %p77
        $region14: #{tpu_custom_call.1} parent=11 // pred_check_branch
          %162 = sbr.rel (%p160) target = $region16
        $region15: #{tpu_custom_call.1} parent=11 // pred_region
          _
        $region16: #{tpu_custom_call.1} parent=11 // pred_fallthru
          _
        // Predicated region
        $region17: #{tpu_custom_call.1} parent=11 // pred_check
          %p163 = pneg %p98
        $region18: #{tpu_custom_call.1} parent=11 // pred_check_branch
          %165 = sbr.rel (%p163) target = $region20
        $region19: #{tpu_custom_call.1} parent=11 // pred_region
          _
        $region20: #{tpu_custom_call.1} parent=11 // pred_fallthru
          _
        // Predicated region
        $region21: #{tpu_custom_call.1} parent=11 // pred_check
          %p166 = pneg %p119
        $region22: #{tpu_custom_call.1} parent=11 // pred_check_branch
          %168 = sbr.rel (%p166) target = $region24
        $region23: #{tpu_custom_call.1} parent=11 // pred_region
          _
        $region24: #{tpu_custom_call.1} parent=11 // pred_fallthru
          _
      $region12: #{tpu_custom_call.1} parent=5 // pred_fallthru
        _
      %p169 = scmp.lt.s32.totalorder %s16, 4
      // Predicated region
      $region25: #{tpu_custom_call.1} parent=5 // pred_check
        %p170 = pneg %p169
      $region26: #{tpu_custom_call.1} parent=5 // pred_check_branch
        %172 = sbr.rel (%p170) target = $region28
      $region27: #{tpu_custom_call.1} parent=5 // pred_region
        // Predicated region
        $region29: #{tpu_custom_call.1} parent=27 // pred_check
          %p173 = pneg %p50
        $region30: #{tpu_custom_call.1} parent=27 // pred_check_branch
          %175 = sbr.rel (%p173) target = $region32
        $region31: #{tpu_custom_call.1} parent=27 // pred_region
          %s176 = sand.u32 %s40, 1
          %s177 = scalar_lea.sflag [#allocation5], %s176
          %s178 = sand.u32 %s40, 1
          %s179 = smul.addr %s178, 40
          %s180 = scalar_lea.vmem [#allocation4], %s179
          %182 = vsyncadd %s177, 0
          %s183 = smul.addr %s23, 10
          %s184 = sadd.s32 %s24, %s183
          %s185 = smul.addr %s184, 8
          %s186 = scalar_lea.hbm %s0, %s185
          %s187 = sshll.u32 %s186, 4
          %s188 = int_to_ptr.hbm [resolvable:$true] %s187
          %s189 = sshll.u32 %s180, 4
          %s190 = int_to_ptr.vmem [resolvable:$true] %s189
          %195 = dma.hbm_to_vmem [thread:$0]  %s188, 640, %s190, %s177, 256, 128, 8
        $region32: #{tpu_custom_call.1} parent=27 // pred_fallthru
          _
      $region28: #{tpu_custom_call.1} parent=5 // pred_fallthru
        _
      %p196 = scmp.le.s32.totalorder 1, %s16
      %p197 = scmp.lt.s32.totalorder %s16, 5
      %p198 = pnand %p196, %p197
      %p199 = pneg %p198
      // Predicated region
      $region33: #{tpu_custom_call.1} parent=5 // pred_check
        _
      $region34: #{tpu_custom_call.1} parent=5 // pred_check_branch
        %201 = sbr.rel (%p198) target = $region36
      $region35: #{tpu_custom_call.1} parent=5 // pred_region
        %s202 = ssub.s32 %s16, 1
        %s203 = sand.u32 %s43, 1
        %s204 = scalar_lea.sflag [#allocation5], %s203
        %s205 = sand.u32 %s43, 1
        %s206 = smul.addr %s205, 40
        %s207 = scalar_lea.vmem [#allocation4], %s206
        // Predicated region
        $region37: #{tpu_custom_call.1} parent=35 // pred_check
          %p208 = pneg %p56
        $region38: #{tpu_custom_call.1} parent=35 // pred_check_branch
          %210 = sbr.rel (%p208) target = $region40
        $region39: #{tpu_custom_call.1} parent=35 // pred_region
          %212 = dma.done %s204, 640
        $region40: #{tpu_custom_call.1} parent=35 // pred_fallthru
          _
        %s213 = sand.u32 %s43, 1
        %s214 = scalar_lea.sflag [#allocation5], %s213
        %s215 = sand.u32 %s43, 1
        %s216 = smul.addr %s215, 40
        %s217 = scalar_lea.vmem [#allocation4], %s216
        %p218 = pneg %p56
        %p219 = pneg %p53
        %p220 = pneg %p77
        %p221 = pneg %p74
        %p222 = pneg %p98
        %p223 = pneg %p95
        %p224 = pneg %p119
        %p225 = pneg %p116
        %p226 = pneg %p145
        %p227 = pneg %p142
        %s228 = sand.u32 %s132, 1
        %s229 = scalar_lea.sflag [#allocation6], %s228
        %s230 = sand.u32 %s132, 1
        %s231 = smul.addr %s230, 16
        %s232 = scalar_lea.vmem [#allocation7], %s231
        %p233 = scmp.eq.s32.totalorder %s26, 0
        // Predicated region
        $region41: #{tpu_custom_call.1} parent=35 // pred_check
          %p234 = pneg %p233
        $region42: #{tpu_custom_call.1} parent=35 // pred_check_branch
          %236 = sbr.rel (%p234) target = $region44
        $region43: #{tpu_custom_call.1} parent=35 // pred_region
          %vm237 = vcmask 7168
          %238 = vst.msk [vmem:[#allocation2] sm:$0xff] %vm237, 0.0
          %239 = vst.msk [vmem:[#allocation3] sm:$0xff] %vm237, 0.0
        $region44: #{tpu_custom_call.1} parent=35 // pred_fallthru
          _
        %v240 = vld [vmem:[%s1] sm:$0xff]
        %v241 = vld [vmem:[%s207] sm:$0xff]
        %v242 = vld [vmem:[%s207 + $0x8] sm:$0xff]
        %v243 = vld [vmem:[%s207 + $0x10] sm:$0xff]
        %v244 = vld [vmem:[%s207 + $0x18] sm:$0xff]
        %v245 = vld [vmem:[%s207 + $0x20] sm:$0xff]
        %vm246 = vcmask 326656
        %v248 = vsel %vm246, %v240, 0
        %250 = vmatpush.msra.mxu0 0.0
        %251 = vmatpush.msra.mxu0 0.0
        %252 = vmatpush.msra.mxu0 0.0
        %253 = vmatpush.msra.mxu0 0.0
        %254 = vmatpush.msra.mxu0 0.0
        %255 = vmatpush.msra.mxu0 0.0
        %256 = vmatpush.msra.mxu0 0.0
        %257 = vmatpush.msra.mxu0 0.0
        %258 = vmatpush.msra.mxu0 0.0
        %259 = vmatpush.msra.mxu0 0.0
        %260 = vmatpush.msra.mxu0 0.0
        %261 = vmatpush.msra.mxu0 %v245
        %262 = vmatpush.msra.mxu0 %v244
        %263 = vmatpush.msra.mxu0 %v243
        %264 = vmatpush.msra.mxu0 %v242
        %265 = vmatpush.msra.mxu0 %v241
        %266 = vmatmul.f32.gmra.mxu0 %v248
        %v267 = vpop.f32.mrf.mxu0
        %v268 = vadd.f32 0.0, %v267
        %269 = vdwg.mxu0
        %v270 = vld [vmem:[#allocation2] sm:$0xff]
        %271 = vadd.xlane.f32.xlu0 %v268
        %v272 = vpop.xlane.xlu0 %271
        %v273 = vadd.f32 %v270, %v272
        %vm274 = vcmask 7168
        %275 = vst.msk [vmem:[#allocation2] sm:$0xff] %vm274, %v273
        %v276 = vld [vmem:[#allocation3] sm:$0xff]
        %v277 = vmul.f32 %v268, %v268
        %278 = vadd.xlane.f32.xlu0 %v277
        %v279 = vpop.xlane.xlu0 %278
        %v280 = vadd.f32 %v276, %v279
        %281 = vst.msk [vmem:[#allocation3] sm:$0xff] %vm274, %v280
        %s282 = smul.u32 %s26, 128
        %s283 = sshra.s32 %s282, 7
        %s284 = sand.u32 %s282, 127
        %s285 = smul.addr %s283, 8
        %s286 = scalar_lea.vmem %s232, %s285 [#allocation7]
        %287 = vst [vmem:[%s286] sm:$0xff] %v268
        %p288 = scmp.eq.s32.totalorder %s26, 1
        // Predicated region
        $region45: #{tpu_custom_call.1} parent=35 // pred_check
          %p289 = pneg %p288
        $region46: #{tpu_custom_call.1} parent=35 // pred_check_branch
          %291 = sbr.rel (%p289) target = $region48
        $region47: #{tpu_custom_call.1} parent=35 // pred_region
          %v292 = vld [vmem:[#allocation2] sm:$0xff]
          %v293 = vmul.f32 %v292, 0.00390625
          %v294 = vld [vmem:[#allocation3] sm:$0xff]
          %v295 = vmul.f32 %v294, 0.00390625
          %v296 = vmul.f32 %v293, %v293
          %v297 = vsub.f32 %v295, %v296
          %v298 = vmax.f32 %v297, 0.0
          %v299 = vadd.f32 %v298, 1e-05
          %v300 = vrsqrt.pop %v299
          %v301 = vmul.f32 %v300, %v299
          %v302 = vmul.f32 %v301, %v300
          %v303 = vmul.f32 0.5, %v302
          %v304 = vsub.f32 1.5, %v303
          %v305 = vmul.f32 %v300, %v304
          %vm306 = vweird.f32 %v299
          %vm307 = vweird.f32 %v300
          %vm308 = vmor %vm306, %vm307
          %v309 = vsel %vm308, %v300, %v305
          %v310 = vld [vmem:[%s2] sm:$0xff]
          %v311 = vmul.f32 %v309, %v310
          %v312 = vld [vmem:[%s3] sm:$0xff]
          %v313 = vmul.f32 %v293, %v311
          %v314 = vsub.f32 %v312, %v313
          %v315 = vld [vmem:[%s232] sm:$0xff]
          %v316 = vld [vmem:[%s232 + $0x8] sm:$0xff]
          %318 = vset.pattern.permute.xlu0 0
          %319 = vperm.xlu0 %318, %v311
          %v320 = vpop.permute.xlu0 %319
          %v322 = vmul.f32 %v315, %v320
          %v323 = vmul.f32 %v316, %v320
          %325 = vset.pattern.permute.xlu0 0
          %326 = vperm.xlu0 %325, %v314
          %v327 = vpop.permute.xlu0 %326
          %v329 = vadd.f32 %v322, %v327
          %v330 = vadd.f32 %v323, %v327
          %331 = vst [vmem:[%s232] sm:$0xff] %v329
          %332 = vst [vmem:[%s232 + $0x8] sm:$0xff] %v330
        $region48: #{tpu_custom_call.1} parent=35 // pred_fallthru
          _
        %s333 = sand.u32 %s132, 1
        %s334 = scalar_lea.sflag [#allocation6], %s333
        %s335 = sand.u32 %s132, 1
        %s336 = smul.addr %s335, 16
        %s337 = scalar_lea.vmem [#allocation7], %s336
        // Predicated region
        $region49: #{tpu_custom_call.1} parent=35 // pred_check
          %p338 = pneg %p142
        $region50: #{tpu_custom_call.1} parent=35 // pred_check_branch
          %340 = sbr.rel (%p338) target = $region52
        $region51: #{tpu_custom_call.1} parent=35 // pred_region
          %342 = vsyncadd %s334, 0
          %s343 = smul.addr %s25, 2
          %s344 = smul.addr %s343, 8
          %s345 = scalar_lea.hbm %s4, %s344
          %s347 = sshll.u32 %s337, 4
          %s348 = int_to_ptr.vmem [resolvable:$true] %s347
          %s349 = sshll.u32 %s345, 4
          %s350 = int_to_ptr.hbm [resolvable:$true] %s349
          %352 = dma.vmem_to_hbm [thread:$0]  %s348, 256, %s350, %s334
        $region52: #{tpu_custom_call.1} parent=35 // pred_fallthru
          _
      $region36: #{tpu_custom_call.1} parent=5 // pred_fallthru
        _
      %p353 = scmp.le.s32.totalorder 2, %s16
      // Predicated region
      $region53: #{tpu_custom_call.1} parent=5 // pred_check
        %p354 = pneg %p353
      $region54: #{tpu_custom_call.1} parent=5 // pred_check_branch
        %356 = sbr.rel (%p354) target = $region56
      $region55: #{tpu_custom_call.1} parent=5 // pred_region
        %s357 = ssub.s32 %s16, 2
        // Predicated region
        $region57: #{tpu_custom_call.1} parent=55 // pred_check
          %p358 = pneg %p148
        $region58: #{tpu_custom_call.1} parent=55 // pred_check_branch
          %360 = sbr.rel (%p358) target = $region60
        $region59: #{tpu_custom_call.1} parent=55 // pred_region
          %s361 = sand.u32 %s133, 1
          %s362 = scalar_lea.sflag [#allocation6], %s361
          %s363 = sand.u32 %s133, 1
          %s364 = smul.addr %s363, 16
          %s365 = scalar_lea.vmem [#allocation7], %s364
          %367 = dma.done %s362, 256
        $region60: #{tpu_custom_call.1} parent=55 // pred_fallthru
          _
      $region56: #{tpu_custom_call.1} parent=5 // pred_fallthru
        _
    $region6: #{tpu_custom_call.1} parent=1 // loop_footer
      %s20 = sadd.s32 1, %s16
    $region7: #{tpu_custom_call.1} parent=1 // loop_footer_branch
      %15 = sbr.rel target = $region3
    $region8: #{tpu_custom_call.1} parent=1 // loop_exit
      _
    %368 = vsyncpa [#allocation5], 1
    %s369 = scalar_lea.sflag [#allocation5], 1
    %370 = vsyncpa %s369, 1
    %371 = vsyncpa [#allocation6], 1
    %s372 = scalar_lea.sflag [#allocation6], 1
    %373 = vsyncpa %s372, 1

</llo_original>
